<compile_context>
chip_gen: v6e
topology: v6e:2x2x1
jax: 0.10.0
libtpu: 0.0.40
codegen_flags: <defaults>
</compile_context>

<pallas_src>
import jax
import jax.numpy as jnp
from jax import lax
from jax.experimental import pallas as pl
from jax.experimental.pallas import tpu as pltpu


HIDDEN = 64

# Row layout of the packed small-parameter slab (8, HIDDEN):
_ROW_W1_SCORE = 0   # score column of w1, transposed          -> (1, HIDDEN)
_ROW_B1 = 1         # bias of layer 1                         -> (1, HIDDEN)
_ROW_B2 = 2         # bias of layer 2                         -> (1, HIDDEN)
_ROW_W3 = 3         # w3 transposed (output head row)         -> (1, HIDDEN)
_ROW_B3 = 4         # b3 in element [4, 0]


def _policy_kernel(img_ref, scores_ref, w1_ref, w2_ref, slab_ref, out_ref):
    # img:    (TB, D_img) bf16   scores: (TB, 1) f32
    # w1:     (D_img, HIDDEN) bf16   w2: (HIDDEN, HIDDEN) bf16
    # slab:   (8, HIDDEN) f32    out: (TB, 2) f32 = [actions | adjusted_scores]
    img = img_ref[...]
    scores = scores_ref[...]

    w1_score = slab_ref[_ROW_W1_SCORE:_ROW_W1_SCORE + 1, :]   # (1, HIDDEN)
    b1 = slab_ref[_ROW_B1:_ROW_B1 + 1, :]                     # (1, HIDDEN)
    b2 = slab_ref[_ROW_B2:_ROW_B2 + 1, :]                     # (1, HIDDEN)
    w3_row = slab_ref[_ROW_W3:_ROW_W3 + 1, :]                 # (1, HIDDEN)
    b3 = slab_ref[_ROW_B3:_ROW_B3 + 1, 0:1]                   # (1, 1)

    # Layer 1: clean bf16 K=D_img MXU matmul with f32 accumulation; the score
    # column of w1 is folded in on the VPU at full f32 precision.
    h1 = jnp.tanh(
        jnp.dot(img, w1_ref[...], preferred_element_type=jnp.float32)
        + scores * w1_score
        + b1
    )
    # Layer 2: 64x64 bf16 MXU matmul, f32 accumulation.
    h2 = jnp.tanh(
        jnp.dot(h1.astype(w2_ref.dtype), w2_ref[...],
                preferred_element_type=jnp.float32)
        + b2
    )
    # Output head: VPU multiply + lane reduce instead of an N=1 MXU matmul.
    actions = jnp.sum(h2 * w3_row, axis=-1, keepdims=True) + b3   # (TB, 1)

    # Single full-block store: column 0 = actions, column 1 = scores*actions.
    # (Built with iota/where so the whole (TB, 2) tile is written in one store,
    #  without relying on minor-dim concatenation.)
    col = lax.broadcasted_iota(jnp.int32, out_ref.shape, 1)       # (TB, 2)
    out_ref[...] = actions * jnp.where(col == 0, jnp.float32(1.0), scores)


def _round_up(x, m):
    return -(-x // m) * m


def _choose_batch_tile(batch, d_img, itemsize,
                       vmem_budget_bytes=24 << 20, max_tile=2048):
    """Pick the batch tile TB.

    Goals (in priority order): fit the double-buffered image tile in a ~24 MiB
    VMEM budget, produce an EVEN number of tiles >= 2 (one per v7x TensorCore)
    at 8-row granularity, and make tiles as large as possible (<= 2048 rows)
    so the ~0.35 us per-grid-step overhead is amortized.
    """
    row_bytes = 2 * d_img * itemsize                 # double-buffered img row
    cap = (vmem_budget_bytes // max(row_bytes, 1)) // 8 * 8
    cap = max(8, min(max_tile, cap))
    n_pairs = max(1, -(-batch // (2 * cap)))         # number of tile pairs
    tb = _round_up(-(-batch // (2 * n_pairs)), 8)    # even split, 8-row aligned
    tb = min(tb, cap)
    if tb >= batch:                                  # tiny batch: one full tile
        return batch
    return tb


def rl_agent_forward(images, scores, params):
    """Forward pass of the RL agent.

    Args:
      images: (B, C, H, W) float (NCHW like PyTorch).
      scores: (B, 1) float detector scores.
      params: dict with 'w1_img' (D_img, HIDDEN) bf16, 'w2' (HIDDEN, HIDDEN)
              bf16 and 'slab' (8, HIDDEN) f32 packed small parameters.

    Returns:
      dict with 'adjusted_scores' (B, 1) and 'actions' (B, 1), float32.
    """
    B = images.shape[0]
    # bf16 image features: halves the dominant HBM stream the kernel reads.
    img_feat = images.reshape(B, -1).astype(jnp.bfloat16)          # (B, D_img)
    d_img = img_feat.shape[1]
    scores = scores.astype(jnp.float32).reshape(B, 1)

    w1 = params["w1_img"]      # (D_img, HIDDEN) bf16, resident across tiles
    w2 = params["w2"]          # (HIDDEN, HIDDEN) bf16, resident
    slab = params["slab"]      # (8, HIDDEN) f32, resident

    TB = _choose_batch_tile(B, d_img, img_feat.dtype.itemsize)
    grid = (pl.cdiv(B, TB),)   # ragged final tile is masked by Pallas: no jnp.pad copy

    out = pl.pallas_call(
        _policy_kernel,
        out_shape=jax.ShapeDtypeStruct((B, 2), jnp.float32),
        grid=grid,
        in_specs=[
            pl.BlockSpec((TB, d_img), lambda i: (i, 0)),           # image features (tiled)
            pl.BlockSpec((TB, 1), lambda i: (i, 0)),               # scores (tiled)
            pl.BlockSpec((d_img, HIDDEN), lambda i: (0, 0)),       # w1 (resident)
            pl.BlockSpec((HIDDEN, HIDDEN), lambda i: (0, 0)),      # w2 (resident)
            pl.BlockSpec((8, HIDDEN), lambda i: (0, 0)),           # packed slab (resident)
        ],
        out_specs=pl.BlockSpec((TB, 2), lambda i: (i, 0)),
        compiler_params=pltpu.CompilerParams(
            dimension_semantics=("parallel",),   # batch tiles shard across v7x TCs
            vmem_limit_bytes=48 << 20,           # let large tiles fit v5e's small default
        ),
    )(img_feat, scores, w1, w2, slab)

    actions = out[:, 0:1]
    adjusted_scores = out[:, 1:2]
    return {"adjusted_scores": adjusted_scores, "actions": actions}


def init_policy_params(d_img, hidden=HIDDEN, key=None):
    """Deterministic synthetic init of the MlpPolicy actor net (split/packed).

    Kernel weights are stored in bf16 (w1_img, w2); f32 originals are kept only
    for the pure-JAX reference check.
    """
    if key is None:
        key = jax.random.PRNGKey(0)
    k1, k2, k3, k4, k5 = jax.random.split(key, 5)
    obs_dim = d_img + 1
    scale1 = 1.0 / jnp.sqrt(jnp.float32(obs_dim))
    scale2 = 1.0 / jnp.sqrt(jnp.float32(hidden))

    w1_full = jax.random.normal(k1, (obs_dim, hidden), jnp.float32) * scale1
    w2 = jax.random.normal(k2, (hidden, hidden), jnp.float32) * scale2
    w3 = jax.random.normal(k3, (hidden, 1), jnp.float32) * scale2
    b1 = jax.random.normal(k4, (hidden,), jnp.float32) * 0.01
    b2 = jax.random.normal(k5, (hidden,), jnp.float32) * 0.01
    b3 = jnp.zeros((1,), jnp.float32)

    w1_img = w1_full[:d_img]                      # (D_img, HIDDEN)
    w1_score = w1_full[d_img:d_img + 1]           # (1, HIDDEN)

    slab = jnp.zeros((8, hidden), jnp.float32)
    slab = slab.at[_ROW_W1_SCORE].set(w1_score[0])
    slab = slab.at[_ROW_B1].set(b1)
    slab = slab.at[_ROW_B2].set(b2)
    slab = slab.at[_ROW_W3].set(w3[:, 0])
    slab = slab.at[_ROW_B3, 0].set(b3[0])

    return {
        "w1_img": w1_img.astype(jnp.bfloat16),
        "w2": w2.astype(jnp.bfloat16),
        "slab": slab,
        # full-precision copies kept only for the pure-JAX reference check
        "w1_full": w1_full, "w2_f32": w2, "w3": w3,
        "b1": b1, "b2": b2, "b3": b3,
    }


if __name__ == "__main__":
    key = jax.random.PRNGKey(0)
    k_img, k_scores, k_params = jax.random.split(key, 3)

    # Small shapes consistent with the module: batch=2, channels=4, spatial=16
    B, C, H, W = 2, 4, 16, 16
    images = jax.random.normal(k_img, (B, C, H, W), jnp.float32)
    scores = jax.random.uniform(k_scores, (B, 1), jnp.float32)

    d_img = C * H * W
    params = init_policy_params(d_img, hidden=HIDDEN, key=k_params)

    out = rl_agent_forward(images, scores, params)
    jax.block_until_ready(out["adjusted_scores"])

    # Pure-JAX f32 reference of the same policy (true concat formulation).
    obs = jnp.concatenate([images.reshape(B, -1), scores], axis=1)
    h1 = jnp.tanh(obs @ params["w1_full"] + params["b1"])
    h2 = jnp.tanh(h1 @ params["w2_f32"] + params["b2"])
    act_ref = h2 @ params["w3"] + params["b3"]
    adj_ref = scores * act_ref

    assert out["actions"].shape == (B, 1)
    assert out["adjusted_scores"].shape == (B, 1)
    # Tolerance relaxed vs. the f32 reference because the kernel runs the
    # image stream and w1/w2 in bf16 (f32 accumulation).
    assert jnp.allclose(out["actions"], act_ref, atol=5e-2, rtol=5e-2)
    assert jnp.allclose(out["adjusted_scores"], adj_ref, atol=5e-2, rtol=5e-2)

    print("KERNEL_OK")
</pallas_src>

<mosaic_0001>
module attributes {stable_mosaic.version = 11 : i64} {
  func.func @_policy_kernel(%arg0: i32, %arg1: memref<2x1024xbf16, #tpu.memory_space<vmem>>, %arg2: memref<2x1xf32, #tpu.memory_space<vmem>>, %arg3: memref<1024x64xbf16, #tpu.memory_space<vmem>>, %arg4: memref<64x64xbf16, #tpu.memory_space<vmem>>, %arg5: memref<8x64xf32, #tpu.memory_space<vmem>>, %arg6: memref<2x2xf32, #tpu.memory_space<vmem>>) attributes {dimension_semantics = [#tpu.dimension_semantics<parallel>], iteration_bounds = array<i64: 1>, scalar_prefetch = 0 : i64, scratch_operands = 0 : i64, tpu.core_type = #tpu.core_type<tc>, window_params = [{transform_indices = @transform_0, window_bounds = array<i64: 2, 1024>}, {transform_indices = @transform_1, window_bounds = array<i64: 2, 1>}, {pipeline_mode = #tpu.pipeline_mode<synchronous>, transform_indices = @transform_2, window_bounds = array<i64: 1024, 64>}, {pipeline_mode = #tpu.pipeline_mode<synchronous>, transform_indices = @transform_3, window_bounds = array<i64: 64, 64>}, {pipeline_mode = #tpu.pipeline_mode<synchronous>, transform_indices = @transform_4, window_bounds = array<i64: 8, 64>}, {transform_indices = @transform_5, window_bounds = array<i64: 2, 2>}]} {
    %c0 = arith.constant 0 : index
    %c0_0 = arith.constant 0 : index
    %0 = vector.load %arg1[%c0, %c0_0] : memref<2x1024xbf16, #tpu.memory_space<vmem>>, vector<2x1024xbf16>
    %c0_1 = arith.constant 0 : index
    %c0_2 = arith.constant 0 : index
    %1 = vector.load %arg2[%c0_1, %c0_2] : memref<2x1xf32, #tpu.memory_space<vmem>>, vector<2x1xf32>
    %c0_3 = arith.constant 0 : index
    %c0_4 = arith.constant 0 : index
    %2 = vector.load %arg5[%c0_3, %c0_4] : memref<8x64xf32, #tpu.memory_space<vmem>>, vector<1x64xf32>
    %c1 = arith.constant 1 : index
    %c0_5 = arith.constant 0 : index
    %3 = vector.load %arg5[%c1, %c0_5] : memref<8x64xf32, #tpu.memory_space<vmem>>, vector<1x64xf32>
    %c2 = arith.constant 2 : index
    %c0_6 = arith.constant 0 : index
    %4 = vector.load %arg5[%c2, %c0_6] : memref<8x64xf32, #tpu.memory_space<vmem>>, vector<1x64xf32>
    %c3 = arith.constant 3 : index
    %c0_7 = arith.constant 0 : index
    %5 = vector.load %arg5[%c3, %c0_7] : memref<8x64xf32, #tpu.memory_space<vmem>>, vector<1x64xf32>
    %c4 = arith.constant 4 : index
    %c0_8 = arith.constant 0 : index
    %6 = vector.load %arg5[%c4, %c0_8] : memref<8x64xf32, #tpu.memory_space<vmem>>, vector<1x1xf32>
    %c0_9 = arith.constant 0 : index
    %c0_10 = arith.constant 0 : index
    %7 = vector.load %arg3[%c0_9, %c0_10] : memref<1024x64xbf16, #tpu.memory_space<vmem>>, vector<1024x64xbf16>
    %cst = arith.constant dense<0.000000e+00> : vector<2x64xf32>
    %8 = tpu.matmul %0, %7, %cst {dimension_numbers = #tpu.dot_dimension_numbers<[1], [0], [0], [1], [0, 0, 1, 1], [], []>} : vector<2x1024xbf16>, vector<1024x64xbf16>, vector<2x64xf32> -> vector<2x64xf32>
    %9 = vector.broadcast %1 : vector<2x1xf32> to vector<2x64xf32>
    %10 = vector.broadcast %2 : vector<1x64xf32> to vector<2x64xf32>
    %11 = arith.mulf %9, %10 : vector<2x64xf32>
    %12 = arith.addf %8, %11 : vector<2x64xf32>
    %13 = vector.broadcast %3 : vector<1x64xf32> to vector<2x64xf32>
    %14 = arith.addf %12, %13 : vector<2x64xf32>
    %15 = math.tanh %14 : vector<2x64xf32>
    %16 = arith.truncf %15 : vector<2x64xf32> to vector<2x64xbf16>
    %c0_11 = arith.constant 0 : index
    %c0_12 = arith.constant 0 : index
    %17 = vector.load %arg4[%c0_11, %c0_12] : memref<64x64xbf16, #tpu.memory_space<vmem>>, vector<64x64xbf16>
    %cst_13 = arith.constant dense<0.000000e+00> : vector<2x64xf32>
    %18 = tpu.matmul %16, %17, %cst_13 {dimension_numbers = #tpu.dot_dimension_numbers<[1], [0], [0], [1], [0, 0, 1, 1], [], []>} : vector<2x64xbf16>, vector<64x64xbf16>, vector<2x64xf32> -> vector<2x64xf32>
    %19 = vector.broadcast %4 : vector<1x64xf32> to vector<2x64xf32>
    %20 = arith.addf %18, %19 : vector<2x64xf32>
    %21 = math.tanh %20 : vector<2x64xf32>
    %22 = vector.broadcast %5 : vector<1x64xf32> to vector<2x64xf32>
    %23 = arith.mulf %21, %22 : vector<2x64xf32>
    %cst_14 = arith.constant dense<0.000000e+00> : vector<2xf32>
    %24 = vector.multi_reduction <add>, %23, %cst_14 [1] : vector<2x64xf32> to vector<2xf32>
    %25 = vector.shape_cast %24 : vector<2xf32> to vector<2x1xf32>
    %26 = vector.broadcast %6 : vector<1x1xf32> to vector<2x1xf32>
    %27 = arith.addf %25, %26 : vector<2x1xf32>
    %28 = tpu.iota {dimensions = array<i32: 1>} : vector<2x2xi32>
    %c0_i32 = arith.constant 0 : i32
    %29 = vector.broadcast %c0_i32 : i32 to vector<2x2xi32>
    %30 = arith.cmpi eq, %28, %29 : vector<2x2xi32>
    %cst_15 = arith.constant 1.000000e+00 : f32
    %31 = vector.broadcast %cst_15 : f32 to vector<2x2xf32>
    %32 = vector.shape_cast %1 : vector<2x1xf32> to vector<2x1xf32>
    %33 = vector.broadcast %32 : vector<2x1xf32> to vector<2x2xf32>
    %34 = arith.select %30, %31, %33 : vector<2x2xi1>, vector<2x2xf32>
    %35 = vector.broadcast %27 : vector<2x1xf32> to vector<2x2xf32>
    %36 = arith.mulf %35, %34 : vector<2x2xf32>
    %c0_16 = arith.constant 0 : index
    %c0_17 = arith.constant 0 : index
    %37 = vector.load %arg6[%c0_16, %c0_17] : memref<2x2xf32, #tpu.memory_space<vmem>>, vector<2x2xf32>
    tpu.vector_store %arg6[%c0_16, %c0_17], %36 {strides = array<i32>} : memref<2x2xf32, #tpu.memory_space<vmem>>, vector<2x2xf32>,
    return
  }
  func.func @transform_0(%arg0: i32) -> (i32, i32) {
    %c0_i32 = arith.constant 0 : i32
    %c0_i32_0 = arith.constant 0 : i32
    return %arg0, %c0_i32 : i32, i32
  }
  func.func @transform_1(%arg0: i32) -> (i32, i32) {
    %c0_i32 = arith.constant 0 : i32
    %c0_i32_0 = arith.constant 0 : i32
    return %arg0, %c0_i32 : i32, i32
  }
  func.func @transform_2(%arg0: i32) -> (i32, i32) {
    %c0_i32 = arith.constant 0 : i32
    %c0_i32_0 = arith.constant 0 : i32
    %c0_i32_1 = arith.constant 0 : i32
    return %c0_i32, %c0_i32_0 : i32, i32
  }
  func.func @transform_3(%arg0: i32) -> (i32, i32) {
    %c0_i32 = arith.constant 0 : i32
    %c0_i32_0 = arith.constant 0 : i32
    %c0_i32_1 = arith.constant 0 : i32
    return %c0_i32, %c0_i32_0 : i32, i32
  }
  func.func @transform_4(%arg0: i32) -> (i32, i32) {
    %c0_i32 = arith.constant 0 : i32
    %c0_i32_0 = arith.constant 0 : i32
    %c0_i32_1 = arith.constant 0 : i32
    return %c0_i32, %c0_i32_0 : i32, i32
  }
  func.func @transform_5(%arg0: i32) -> (i32, i32) {
    %c0_i32 = arith.constant 0 : i32
    %c0_i32_0 = arith.constant 0 : i32
    return %arg0, %c0_i32 : i32, i32
  }
}

</mosaic_0001>

<llo_original>
// kernel: tpu_custom_call.1
$region0: #{tpu_custom_call.1}
  #allocation0 [shape = 'u32[]', space=smem, size = 0x4, offset = 0x4, fixed_abs, tag = 'smem constant byte address 0x4 - core index']
  #allocation1 [shape = 'u32[144,128]{1,0:T(1,128)}', space=vmem, size = 0x12000, scoped, tag = 'internal scratch']
  %s0 = inlined_call_operand.vmem [shape: bf16[2,1024], index: 0, kind: input, shape index: {}]
  %s1 = inlined_call_operand.vmem [shape: f32[2,1], index: 1, kind: input, shape index: {}]
  %s2 = inlined_call_operand.vmem [shape: bf16[1024,64], index: 2, kind: input, shape index: {}]
  %s3 = inlined_call_operand.vmem [shape: bf16[64,64], index: 3, kind: input, shape index: {}]
  %s4 = inlined_call_operand.vmem [shape: f32[8,64], index: 4, kind: input, shape index: {}]
  %s5 = inlined_call_operand.hbm [shape: f32[2,2], index: 5, kind: output, shape index: {}]
  %s6 = sld [smem:[#allocation0]]
  $region30: #{tpu_custom_call.1} parent=0
    _
  %s8 = ssub.s32 1, %s6
  %s9 = scalar_select 0, %s8, %s6
  $region1: #{tpu_custom_call.1} parent=0
    #allocation2 [shape = 'u8[1024]{0}', space=vmem, size = 0x400, scoped, tag = 'output window, operand 0, single buffered']
    #allocation3 [shape = 's32[1]{0}', space=sflag, size = 0x4, scoped, tag = 'scoped memory for tpu_custom_call.1']
    %10 = vsyncpa [#allocation3], 0
    // Predicated region
    $region2: #{tpu_custom_call.1} parent=1 // pred_check
      _
    $region3: #{tpu_custom_call.1} parent=1 // pred_check_branch
      %12 = sbr.rel (0) target = $region5
    $region4: #{tpu_custom_call.1} parent=1 // pred_region
      _
    $region5: #{tpu_custom_call.1} parent=1 // pred_fallthru
      _
    // Predicated region
    $region6: #{tpu_custom_call.1} parent=1 // pred_check
      _
    $region7: #{tpu_custom_call.1} parent=1 // pred_check_branch
      %14 = sbr.rel (0) target = $region9
    $region8: #{tpu_custom_call.1} parent=1 // pred_region
      _
    $region9: #{tpu_custom_call.1} parent=1 // pred_fallthru
      _
    // Predicated region
    $region10: #{tpu_custom_call.1} parent=1 // pred_check
      _
    $region11: #{tpu_custom_call.1} parent=1 // pred_check_branch
      %16 = sbr.rel (0) target = $region13
    $region12: #{tpu_custom_call.1} parent=1 // pred_region
      _
    $region13: #{tpu_custom_call.1} parent=1 // pred_fallthru
      _
    // Predicated region
    $region14: #{tpu_custom_call.1} parent=1 // pred_check
      _
    $region15: #{tpu_custom_call.1} parent=1 // pred_check_branch
      %18 = sbr.rel (0) target = $region17
    $region16: #{tpu_custom_call.1} parent=1 // pred_region
      _
    $region17: #{tpu_custom_call.1} parent=1 // pred_fallthru
      _
    // Predicated region
    $region18: #{tpu_custom_call.1} parent=1 // pred_check
      _
    $region19: #{tpu_custom_call.1} parent=1 // pred_check_branch
      %20 = sbr.rel (0) target = $region21
    $region20: #{tpu_custom_call.1} parent=1 // pred_region
      _
    $region21: #{tpu_custom_call.1} parent=1 // pred_fallthru
      _
    %v22 = vld [vmem:[%s0] sm:$0xff]
    %v23 = vld [vmem:[%s1] sm:$0x3]
    %v24 = vld [vmem:[%s4] sm:$0x1]
    %v25 = vld [vmem:[%s4 + $0x1] sm:$0x1]
    %v26 = vld [vmem:[%s4 + $0x2] sm:$0x1]
    %v27 = vld [vmem:[%s4 + $0x3] sm:$0x1]
    %v28 = vld [vmem:[%s4 + $0x4] sm:$0x1]
    %v29 = vld [vmem:[%s2] sm:$0xf]
    %v30 = vld [vmem:[%s2 + $0x4] sm:$0xf]
    %v31 = vld [vmem:[%s2 + $0x8] sm:$0xf]
    %v32 = vld [vmem:[%s2 + $0xc] sm:$0xf]
    %v33 = vld [vmem:[%s2 + $0x10] sm:$0xf]
    %v34 = vld [vmem:[%s2 + $0x14] sm:$0xf]
    %v35 = vld [vmem:[%s2 + $0x18] sm:$0xf]
    %v36 = vld [vmem:[%s2 + $0x1c] sm:$0xf]
    %v37 = vld [vmem:[%s2 + $0x20] sm:$0xf]
    %v38 = vld [vmem:[%s2 + $0x24] sm:$0xf]
    %v39 = vld [vmem:[%s2 + $0x28] sm:$0xf]
    %v40 = vld [vmem:[%s2 + $0x2c] sm:$0xf]
    %v41 = vld [vmem:[%s2 + $0x30] sm:$0xf]
    %v42 = vld [vmem:[%s2 + $0x34] sm:$0xf]
    %v43 = vld [vmem:[%s2 + $0x38] sm:$0xf]
    %v44 = vld [vmem:[%s2 + $0x3c] sm:$0xf]
    %v45 = vld [vmem:[%s2 + $0x40] sm:$0xf]
    %v46 = vld [vmem:[%s2 + $0x44] sm:$0xf]
    %v47 = vld [vmem:[%s2 + $0x48] sm:$0xf]
    %v48 = vld [vmem:[%s2 + $0x4c] sm:$0xf]
    %v49 = vld [vmem:[%s2 + $0x50] sm:$0xf]
    %v50 = vld [vmem:[%s2 + $0x54] sm:$0xf]
    %v51 = vld [vmem:[%s2 + $0x58] sm:$0xf]
    %v52 = vld [vmem:[%s2 + $0x5c] sm:$0xf]
    %v53 = vld [vmem:[%s2 + $0x60] sm:$0xf]
    %v54 = vld [vmem:[%s2 + $0x64] sm:$0xf]
    %v55 = vld [vmem:[%s2 + $0x68] sm:$0xf]
    %v56 = vld [vmem:[%s2 + $0x6c] sm:$0xf]
    %v57 = vld [vmem:[%s2 + $0x70] sm:$0xf]
    %v58 = vld [vmem:[%s2 + $0x74] sm:$0xf]
    %v59 = vld [vmem:[%s2 + $0x78] sm:$0xf]
    %v60 = vld [vmem:[%s2 + $0x7c] sm:$0xf]
    %v61 = vld [vmem:[%s2 + $0x80] sm:$0xf]
    %v62 = vld [vmem:[%s2 + $0x84] sm:$0xf]
    %v63 = vld [vmem:[%s2 + $0x88] sm:$0xf]
    %v64 = vld [vmem:[%s2 + $0x8c] sm:$0xf]
    %v65 = vld [vmem:[%s2 + $0x90] sm:$0xf]
    %v66 = vld [vmem:[%s2 + $0x94] sm:$0xf]
    %v67 = vld [vmem:[%s2 + $0x98] sm:$0xf]
    %v68 = vld [vmem:[%s2 + $0x9c] sm:$0xf]
    %v69 = vld [vmem:[%s2 + $0xa0] sm:$0xf]
    %v70 = vld [vmem:[%s2 + $0xa4] sm:$0xf]
    %v71 = vld [vmem:[%s2 + $0xa8] sm:$0xf]
    %v72 = vld [vmem:[%s2 + $0xac] sm:$0xf]
    %v73 = vld [vmem:[%s2 + $0xb0] sm:$0xf]
    %v74 = vld [vmem:[%s2 + $0xb4] sm:$0xf]
    %v75 = vld [vmem:[%s2 + $0xb8] sm:$0xf]
    %v76 = vld [vmem:[%s2 + $0xbc] sm:$0xf]
    %v77 = vld [vmem:[%s2 + $0xc0] sm:$0xf]
    %v78 = vld [vmem:[%s2 + $0xc4] sm:$0xf]
    %v79 = vld [vmem:[%s2 + $0xc8] sm:$0xf]
    %v80 = vld [vmem:[%s2 + $0xcc] sm:$0xf]
    %v81 = vld [vmem:[%s2 + $0xd0] sm:$0xf]
    %v82 = vld [vmem:[%s2 + $0xd4] sm:$0xf]
    %v83 = vld [vmem:[%s2 + $0xd8] sm:$0xf]
    %v84 = vld [vmem:[%s2 + $0xdc] sm:$0xf]
    %v85 = vld [vmem:[%s2 + $0xe0] sm:$0xf]
    %v86 = vld [vmem:[%s2 + $0xe4] sm:$0xf]
    %v87 = vld [vmem:[%s2 + $0xe8] sm:$0xf]
    %v88 = vld [vmem:[%s2 + $0xec] sm:$0xf]
    %v89 = vld [vmem:[%s2 + $0xf0] sm:$0xf]
    %v90 = vld [vmem:[%s2 + $0xf4] sm:$0xf]
    %v91 = vld [vmem:[%s2 + $0xf8] sm:$0xf]
    %v92 = vld [vmem:[%s2 + $0xfc] sm:$0xf]
    %v93 = vld [vmem:[%s2 + $0x100] sm:$0xf]
    %v94 = vld [vmem:[%s2 + $0x104] sm:$0xf]
    %v95 = vld [vmem:[%s2 + $0x108] sm:$0xf]
    %v96 = vld [vmem:[%s2 + $0x10c] sm:$0xf]
    %v97 = vld [vmem:[%s2 + $0x110] sm:$0xf]
    %v98 = vld [vmem:[%s2 + $0x114] sm:$0xf]
    %v99 = vld [vmem:[%s2 + $0x118] sm:$0xf]
    %v100 = vld [vmem:[%s2 + $0x11c] sm:$0xf]
    %v101 = vld [vmem:[%s2 + $0x120] sm:$0xf]
    %v102 = vld [vmem:[%s2 + $0x124] sm:$0xf]
    %v103 = vld [vmem:[%s2 + $0x128] sm:$0xf]
    %v104 = vld [vmem:[%s2 + $0x12c] sm:$0xf]
    %v105 = vld [vmem:[%s2 + $0x130] sm:$0xf]
    %v106 = vld [vmem:[%s2 + $0x134] sm:$0xf]
    %v107 = vld [vmem:[%s2 + $0x138] sm:$0xf]
    %v108 = vld [vmem:[%s2 + $0x13c] sm:$0xf]
    %v109 = vld [vmem:[%s2 + $0x140] sm:$0xf]
    %v110 = vld [vmem:[%s2 + $0x144] sm:$0xf]
    %v111 = vld [vmem:[%s2 + $0x148] sm:$0xf]
    %v112 = vld [vmem:[%s2 + $0x14c] sm:$0xf]
    %v113 = vld [vmem:[%s2 + $0x150] sm:$0xf]
    %v114 = vld [vmem:[%s2 + $0x154] sm:$0xf]
    %v115 = vld [vmem:[%s2 + $0x158] sm:$0xf]
    %v116 = vld [vmem:[%s2 + $0x15c] sm:$0xf]
    %v117 = vld [vmem:[%s2 + $0x160] sm:$0xf]
    %v118 = vld [vmem:[%s2 + $0x164] sm:$0xf]
    %v119 = vld [vmem:[%s2 + $0x168] sm:$0xf]
    %v120 = vld [vmem:[%s2 + $0x16c] sm:$0xf]
    %v121 = vld [vmem:[%s2 + $0x170] sm:$0xf]
    %v122 = vld [vmem:[%s2 + $0x174] sm:$0xf]
    %v123 = vld [vmem:[%s2 + $0x178] sm:$0xf]
    %v124 = vld [vmem:[%s2 + $0x17c] sm:$0xf]
    %v125 = vld [vmem:[%s2 + $0x180] sm:$0xf]
    %v126 = vld [vmem:[%s2 + $0x184] sm:$0xf]
    %v127 = vld [vmem:[%s2 + $0x188] sm:$0xf]
    %v128 = vld [vmem:[%s2 + $0x18c] sm:$0xf]
    %v129 = vld [vmem:[%s2 + $0x190] sm:$0xf]
    %v130 = vld [vmem:[%s2 + $0x194] sm:$0xf]
    %v131 = vld [vmem:[%s2 + $0x198] sm:$0xf]
    %v132 = vld [vmem:[%s2 + $0x19c] sm:$0xf]
    %v133 = vld [vmem:[%s2 + $0x1a0] sm:$0xf]
    %v134 = vld [vmem:[%s2 + $0x1a4] sm:$0xf]
    %v135 = vld [vmem:[%s2 + $0x1a8] sm:$0xf]
    %v136 = vld [vmem:[%s2 + $0x1ac] sm:$0xf]
    %v137 = vld [vmem:[%s2 + $0x1b0] sm:$0xf]
    %v138 = vld [vmem:[%s2 + $0x1b4] sm:$0xf]
    %v139 = vld [vmem:[%s2 + $0x1b8] sm:$0xf]
    %v140 = vld [vmem:[%s2 + $0x1bc] sm:$0xf]
    %v141 = vld [vmem:[%s2 + $0x1c0] sm:$0xf]
    %v142 = vld [vmem:[%s2 + $0x1c4] sm:$0xf]
    %v143 = vld [vmem:[%s2 + $0x1c8] sm:$0xf]
    %v144 = vld [vmem:[%s2 + $0x1cc] sm:$0xf]
    %v145 = vld [vmem:[%s2 + $0x1d0] sm:$0xf]
    %v146 = vld [vmem:[%s2 + $0x1d4] sm:$0xf]
    %v147 = vld [vmem:[%s2 + $0x1d8] sm:$0xf]
    %v148 = vld [vmem:[%s2 + $0x1dc] sm:$0xf]
    %v149 = vld [vmem:[%s2 + $0x1e0] sm:$0xf]
    %v150 = vld [vmem:[%s2 + $0x1e4] sm:$0xf]
    %v151 = vld [vmem:[%s2 + $0x1e8] sm:$0xf]
    %v152 = vld [vmem:[%s2 + $0x1ec] sm:$0xf]
    %v153 = vld [vmem:[%s2 + $0x1f0] sm:$0xf]
    %v154 = vld [vmem:[%s2 + $0x1f4] sm:$0xf]
    %v155 = vld [vmem:[%s2 + $0x1f8] sm:$0xf]
    %v156 = vld [vmem:[%s2 + $0x1fc] sm:$0xf]
    %158 = vset.pattern.permute.xlu0 0
    %159 = vperm.xlu0 %158, %v23
    %v160 = vpop.permute.xlu0 %159
    %v162 = vlaneseq
    %v163 = vshrl.u32 %v162, 7
    %v164 = vsub.s32 0, %v163
    %v165 = vrot.slane %v24, %v164
    %v166 = vmul.f32 %v160, %v165
    %v168 = vcombine.high %v22, %v22
    %v170 = vunpack.c.l.s4 1966171168
    %v171 = vunpack.c.0.s8 %v170
    %v172 = vlaneseq
    %v173 = vshrl.u32 %v172, 7
    %v174 = vsub.s32 %v171, %v173
    %v175 = vrot.slane %v22, %v174
    %v177 = vunpack.c.l.s4 1966171168
    %v178 = vunpack.c.0.s8 %v177
    %v179 = vlaneseq
    %v180 = vshrl.u32 %v179, 7
    %v181 = vsub.s32 %v178, %v180
    %v182 = vrot.slane %v168, %v181
    %v183 = vcombine.high %v175, %v175
    %v184 = vcombine.high %v182, %v182
    %v186 = vunpack.c.l.s4 1966171168
    %v187 = vunpack.c.0.s8 %v186
    %v188 = vlaneseq
    %v189 = vshrl.u32 %v188, 7
    %v190 = vsub.s32 %v187, %v189
    %v191 = vrot.slane %v175, %v190
    %v193 = vunpack.c.l.s4 1966171168
    %v194 = vunpack.c.0.s8 %v193
    %v195 = vlaneseq
    %v196 = vshrl.u32 %v195, 7
    %v197 = vsub.s32 %v194, %v196
    %v198 = vrot.slane %v182, %v197
    %v200 = vunpack.c.l.s4 1966171168
    %v201 = vunpack.c.0.s8 %v200
    %v202 = vlaneseq
    %v203 = vshrl.u32 %v202, 7
    %v204 = vsub.s32 %v201, %v203
    %v205 = vrot.slane %v183, %v204
    %v207 = vunpack.c.l.s4 1966171168
    %v208 = vunpack.c.0.s8 %v207
    %v209 = vlaneseq
    %v210 = vshrl.u32 %v209, 7
    %v211 = vsub.s32 %v208, %v210
    %v212 = vrot.slane %v184, %v211
    %v213 = vcombine.high %v191, %v191
    %v214 = vcombine.high %v198, %v198
    %v215 = vcombine.high %v205, %v205
    %v216 = vcombine.high %v212, %v212
    %v353 = vunpack.c.l.b16 %v29
    %v354 = vunpack.c.l.b16 %v30
    %v355 = vunpack.c.l.b16 %v31
    %v356 = vunpack.c.l.b16 %v32
    %v357 = vunpack.c.l.b16 %v33
    %v358 = vunpack.c.l.b16 %v34
    %v359 = vunpack.c.l.b16 %v35
    %v360 = vunpack.c.l.b16 %v36
    %v361 = vunpack.c.l.b16 %v37
    %v362 = vunpack.c.l.b16 %v38
    %v363 = vunpack.c.l.b16 %v39
    %v364 = vunpack.c.l.b16 %v40
    %v365 = vunpack.c.l.b16 %v41
    %v366 = vunpack.c.l.b16 %v42
    %v367 = vunpack.c.l.b16 %v43
    %v368 = vunpack.c.l.b16 %v44
    %v369 = vunpack.c.l.b16 %v45
    %v370 = vunpack.c.l.b16 %v46
    %v371 = vunpack.c.l.b16 %v47
    %v372 = vunpack.c.l.b16 %v48
    %v373 = vunpack.c.l.b16 %v49
    %v374 = vunpack.c.l.b16 %v50
    %v375 = vunpack.c.l.b16 %v51
    %v376 = vunpack.c.l.b16 %v52
    %v377 = vunpack.c.l.b16 %v53
    %v378 = vunpack.c.l.b16 %v54
    %v379 = vunpack.c.l.b16 %v55
    %v380 = vunpack.c.l.b16 %v56
    %v381 = vunpack.c.l.b16 %v57
    %v382 = vunpack.c.l.b16 %v58
    %v383 = vunpack.c.l.b16 %v59
    %v384 = vunpack.c.l.b16 %v60
    %v385 = vunpack.c.l.b16 %v61
    %v386 = vunpack.c.l.b16 %v62
    %v387 = vunpack.c.l.b16 %v63
    %v388 = vunpack.c.l.b16 %v64
    %v389 = vunpack.c.l.b16 %v65
    %v390 = vunpack.c.l.b16 %v66
    %v391 = vunpack.c.l.b16 %v67
    %v392 = vunpack.c.l.b16 %v68
    %v393 = vunpack.c.l.b16 %v69
    %v394 = vunpack.c.l.b16 %v70
    %v395 = vunpack.c.l.b16 %v71
    %v396 = vunpack.c.l.b16 %v72
    %v397 = vunpack.c.l.b16 %v73
    %v398 = vunpack.c.l.b16 %v74
    %v399 = vunpack.c.l.b16 %v75
    %v400 = vunpack.c.l.b16 %v76
    %v401 = vunpack.c.l.b16 %v77
    %v402 = vunpack.c.l.b16 %v78
    %v403 = vunpack.c.l.b16 %v79
    %v404 = vunpack.c.l.b16 %v80
    %v405 = vunpack.c.l.b16 %v81
    %v406 = vunpack.c.l.b16 %v82
    %v407 = vunpack.c.l.b16 %v83
    %v408 = vunpack.c.l.b16 %v84
    %v409 = vunpack.c.l.b16 %v85
    %v410 = vunpack.c.l.b16 %v86
    %v411 = vunpack.c.l.b16 %v87
    %v412 = vunpack.c.l.b16 %v88
    %v413 = vunpack.c.l.b16 %v89
    %v414 = vunpack.c.l.b16 %v90
    %v415 = vunpack.c.l.b16 %v91
    %v416 = vunpack.c.l.b16 %v92
    %v417 = vunpack.c.l.b16 %v93
    %v418 = vunpack.c.l.b16 %v94
    %v419 = vunpack.c.l.b16 %v95
    %v420 = vunpack.c.l.b16 %v96
    %v421 = vunpack.c.l.b16 %v97
    %v422 = vunpack.c.l.b16 %v98
    %v423 = vunpack.c.l.b16 %v99
    %v424 = vunpack.c.l.b16 %v100
    %v425 = vunpack.c.l.b16 %v101
    %v426 = vunpack.c.l.b16 %v102
    %v427 = vunpack.c.l.b16 %v103
    %v428 = vunpack.c.l.b16 %v104
    %v429 = vunpack.c.l.b16 %v105
    %v430 = vunpack.c.l.b16 %v106
    %v431 = vunpack.c.l.b16 %v107
    %v432 = vunpack.c.l.b16 %v108
    %v433 = vunpack.c.l.b16 %v109
    %v434 = vunpack.c.l.b16 %v110
    %v435 = vunpack.c.l.b16 %v111
    %v436 = vunpack.c.l.b16 %v112
    %v437 = vunpack.c.l.b16 %v113
    %v438 = vunpack.c.l.b16 %v114
    %v439 = vunpack.c.l.b16 %v115
    %v440 = vunpack.c.l.b16 %v116
    %v441 = vunpack.c.l.b16 %v117
    %v442 = vunpack.c.l.b16 %v118
    %v443 = vunpack.c.l.b16 %v119
    %v444 = vunpack.c.l.b16 %v120
    %v445 = vunpack.c.l.b16 %v121
    %v446 = vunpack.c.l.b16 %v122
    %v447 = vunpack.c.l.b16 %v123
    %v448 = vunpack.c.l.b16 %v124
    %v449 = vunpack.c.l.b16 %v125
    %v450 = vunpack.c.l.b16 %v126
    %v451 = vunpack.c.l.b16 %v127
    %v452 = vunpack.c.l.b16 %v128
    %v453 = vunpack.c.l.b16 %v129
    %v454 = vunpack.c.l.b16 %v130
    %v455 = vunpack.c.l.b16 %v131
    %v456 = vunpack.c.l.b16 %v132
    %v457 = vunpack.c.l.b16 %v133
    %v458 = vunpack.c.l.b16 %v134
    %v459 = vunpack.c.l.b16 %v135
    %v460 = vunpack.c.l.b16 %v136
    %v461 = vunpack.c.l.b16 %v137
    %v462 = vunpack.c.l.b16 %v138
    %v463 = vunpack.c.l.b16 %v139
    %v464 = vunpack.c.l.b16 %v140
    %v465 = vunpack.c.l.b16 %v141
    %v466 = vunpack.c.l.b16 %v142
    %v467 = vunpack.c.l.b16 %v143
    %v468 = vunpack.c.l.b16 %v144
    %v469 = vunpack.c.l.b16 %v145
    %v470 = vunpack.c.l.b16 %v146
    %v471 = vunpack.c.l.b16 %v147
    %v472 = vunpack.c.l.b16 %v148
    %v473 = vunpack.c.l.b16 %v149
    %v474 = vunpack.c.l.b16 %v150
    %v475 = vunpack.c.l.b16 %v151
    %v476 = vunpack.c.l.b16 %v152
    %v477 = vunpack.c.l.b16 %v153
    %v478 = vunpack.c.l.b16 %v154
    %v479 = vunpack.c.l.b16 %v155
    %v480 = vunpack.c.l.b16 %v156
    %v481 = vpack.c.b16 %v354, %v353
    %v482 = vpack.c.b16 %v356, %v355
    %v483 = vpack.c.b16 %v358, %v357
    %v484 = vpack.c.b16 %v360, %v359
    %v485 = vpack.c.b16 %v362, %v361
    %v486 = vpack.c.b16 %v364, %v363
    %v487 = vpack.c.b16 %v366, %v365
    %v488 = vpack.c.b16 %v368, %v367
    %v489 = vpack.c.b16 %v370, %v369
    %v490 = vpack.c.b16 %v372, %v371
    %v491 = vpack.c.b16 %v374, %v373
    %v492 = vpack.c.b16 %v376, %v375
    %v493 = vpack.c.b16 %v378, %v377
    %v494 = vpack.c.b16 %v380, %v379
    %v495 = vpack.c.b16 %v382, %v381
    %v496 = vpack.c.b16 %v384, %v383
    %v497 = vpack.c.b16 %v386, %v385
    %v498 = vpack.c.b16 %v388, %v387
    %v499 = vpack.c.b16 %v390, %v389
    %v500 = vpack.c.b16 %v392, %v391
    %v501 = vpack.c.b16 %v394, %v393
    %v502 = vpack.c.b16 %v396, %v395
    %v503 = vpack.c.b16 %v398, %v397
    %v504 = vpack.c.b16 %v400, %v399
    %v505 = vpack.c.b16 %v402, %v401
    %v506 = vpack.c.b16 %v404, %v403
    %v507 = vpack.c.b16 %v406, %v405
    %v508 = vpack.c.b16 %v408, %v407
    %v509 = vpack.c.b16 %v410, %v409
    %v510 = vpack.c.b16 %v412, %v411
    %v511 = vpack.c.b16 %v414, %v413
    %v512 = vpack.c.b16 %v416, %v415
    %v513 = vpack.c.b16 %v418, %v417
    %v514 = vpack.c.b16 %v420, %v419
    %v515 = vpack.c.b16 %v422, %v421
    %v516 = vpack.c.b16 %v424, %v423
    %v517 = vpack.c.b16 %v426, %v425
    %v518 = vpack.c.b16 %v428, %v427
    %v519 = vpack.c.b16 %v430, %v429
    %v520 = vpack.c.b16 %v432, %v431
    %v521 = vpack.c.b16 %v434, %v433
    %v522 = vpack.c.b16 %v436, %v435
    %v523 = vpack.c.b16 %v438, %v437
    %v524 = vpack.c.b16 %v440, %v439
    %v525 = vpack.c.b16 %v442, %v441
    %v526 = vpack.c.b16 %v444, %v443
    %v527 = vpack.c.b16 %v446, %v445
    %v528 = vpack.c.b16 %v448, %v447
    %v529 = vpack.c.b16 %v450, %v449
    %v530 = vpack.c.b16 %v452, %v451
    %v531 = vpack.c.b16 %v454, %v453
    %v532 = vpack.c.b16 %v456, %v455
    %v533 = vpack.c.b16 %v458, %v457
    %v534 = vpack.c.b16 %v460, %v459
    %v535 = vpack.c.b16 %v462, %v461
    %v536 = vpack.c.b16 %v464, %v463
    %v537 = vpack.c.b16 %v466, %v465
    %v538 = vpack.c.b16 %v468, %v467
    %v539 = vpack.c.b16 %v470, %v469
    %v540 = vpack.c.b16 %v472, %v471
    %v541 = vpack.c.b16 %v474, %v473
    %v542 = vpack.c.b16 %v476, %v475
    %v543 = vpack.c.b16 %v478, %v477
    %v544 = vpack.c.b16 %v480, %v479
    %609 = vmatprep.subr.bf16.mxu0 0
    %610 = vmatpush1.bf16.msra.mxu0 %v488
    %611 = vmatprep.subr.bf16.mxu0 0
    %612 = vmatpush1.bf16.msra.mxu0 %v487
    %613 = vmatprep.subr.bf16.mxu0 0
    %614 = vmatpush1.bf16.msra.mxu0 %v486
    %615 = vmatprep.subr.bf16.mxu0 0
    %616 = vmatpush1.bf16.msra.mxu0 %v485
    %617 = vmatprep.subr.bf16.mxu0 0
    %618 = vmatpush1.bf16.msra.mxu0 %v484
    %619 = vmatprep.subr.bf16.mxu0 0
    %620 = vmatpush1.bf16.msra.mxu0 %v483
    %621 = vmatprep.subr.bf16.mxu0 0
    %622 = vmatpush1.bf16.msra.mxu0 %v482
    %623 = vmatprep.subr.bf16.mxu0 0
    %624 = vmatpush1.bf16.msra.mxu0 %v481
    %625 = vmatprep.subr.bf16.mxu0 0
    %626 = vmatpush2.bf16.msra.mxu0 %v496
    %627 = vmatprep.subr.bf16.mxu0 0
    %628 = vmatpush2.bf16.msra.mxu0 %v495
    %629 = vmatprep.subr.bf16.mxu0 0
    %630 = vmatpush2.bf16.msra.mxu0 %v494
    %631 = vmatprep.subr.bf16.mxu0 0
    %632 = vmatpush2.bf16.msra.mxu0 %v493
    %633 = vmatprep.subr.bf16.mxu0 0
    %634 = vmatpush2.bf16.msra.mxu0 %v492
    %635 = vmatprep.subr.bf16.mxu0 0
    %636 = vmatpush2.bf16.msra.mxu0 %v491
    %637 = vmatprep.subr.bf16.mxu0 0
    %638 = vmatpush2.bf16.msra.mxu0 %v490
    %639 = vmatprep.subr.bf16.mxu0 0
    %640 = vmatpush2.bf16.msra.mxu0 %v489
    %641 = vmatprep.mubr.bf16.mxu0 %v205
    %642 = vmatmul.mubr.bf16.gmra.mxu0 %v191
    %v643 = vpop.f32.mrf.mxu0
    %v644 = vadd.f32 %v166, %v643
    %v645 = vpop.f32.mrf.mxu0
    %v646 = vpop.f32.mrf.mxu0
    %v647 = vpop.f32.mrf.mxu0
    %648 = vdwg.mxu0
    %649 = vmatprep.subr.bf16.mxu0 0
    %650 = vmatpush1.bf16.msra.mxu0 %v504
    %651 = vmatprep.subr.bf16.mxu0 0
    %652 = vmatpush1.bf16.msra.mxu0 %v503
    %653 = vmatprep.subr.bf16.mxu0 0
    %654 = vmatpush1.bf16.msra.mxu0 %v502
    %655 = vmatprep.subr.bf16.mxu0 0
    %656 = vmatpush1.bf16.msra.mxu0 %v501
    %657 = vmatprep.subr.bf16.mxu0 0
    %658 = vmatpush1.bf16.msra.mxu0 %v500
    %659 = vmatprep.subr.bf16.mxu0 0
    %660 = vmatpush1.bf16.msra.mxu0 %v499
    %661 = vmatprep.subr.bf16.mxu0 0
    %662 = vmatpush1.bf16.msra.mxu0 %v498
    %663 = vmatprep.subr.bf16.mxu0 0
    %664 = vmatpush1.bf16.msra.mxu0 %v497
    %665 = vmatprep.subr.bf16.mxu0 0
    %666 = vmatpush2.bf16.msra.mxu0 %v512
    %667 = vmatprep.subr.bf16.mxu0 0
    %668 = vmatpush2.bf16.msra.mxu0 %v511
    %669 = vmatprep.subr.bf16.mxu0 0
    %670 = vmatpush2.bf16.msra.mxu0 %v510
    %671 = vmatprep.subr.bf16.mxu0 0
    %672 = vmatpush2.bf16.msra.mxu0 %v509
    %673 = vmatprep.subr.bf16.mxu0 0
    %674 = vmatpush2.bf16.msra.mxu0 %v508
    %675 = vmatprep.subr.bf16.mxu0 0
    %676 = vmatpush2.bf16.msra.mxu0 %v507
    %677 = vmatprep.subr.bf16.mxu0 0
    %678 = vmatpush2.bf16.msra.mxu0 %v506
    %679 = vmatprep.subr.bf16.mxu0 0
    %680 = vmatpush2.bf16.msra.mxu0 %v505
    %681 = vmatprep.mubr.bf16.mxu0 %v215
    %682 = vmatmul.mubr.bf16.gmra.mxu0 %v213
    %v683 = vpop.f32.mrf.mxu0
    %v684 = vadd.f32 %v644, %v683
    %v685 = vpop.f32.mrf.mxu0
    %v686 = vpop.f32.mrf.mxu0
    %v687 = vpop.f32.mrf.mxu0
    %688 = vdwg.mxu0
    %689 = vmatprep.subr.bf16.mxu0 0
    %690 = vmatpush1.bf16.msra.mxu0 %v520
    %691 = vmatprep.subr.bf16.mxu0 0
    %692 = vmatpush1.bf16.msra.mxu0 %v519
    %693 = vmatprep.subr.bf16.mxu0 0
    %694 = vmatpush1.bf16.msra.mxu0 %v518
    %695 = vmatprep.subr.bf16.mxu0 0
    %696 = vmatpush1.bf16.msra.mxu0 %v517
    %697 = vmatprep.subr.bf16.mxu0 0
    %698 = vmatpush1.bf16.msra.mxu0 %v516
    %699 = vmatprep.subr.bf16.mxu0 0
    %700 = vmatpush1.bf16.msra.mxu0 %v515
    %701 = vmatprep.subr.bf16.mxu0 0
    %702 = vmatpush1.bf16.msra.mxu0 %v514
    %703 = vmatprep.subr.bf16.mxu0 0
    %704 = vmatpush1.bf16.msra.mxu0 %v513
    %705 = vmatprep.subr.bf16.mxu0 0
    %706 = vmatpush2.bf16.msra.mxu0 %v528
    %707 = vmatprep.subr.bf16.mxu0 0
    %708 = vmatpush2.bf16.msra.mxu0 %v527
    %709 = vmatprep.subr.bf16.mxu0 0
    %710 = vmatpush2.bf16.msra.mxu0 %v526
    %711 = vmatprep.subr.bf16.mxu0 0
    %712 = vmatpush2.bf16.msra.mxu0 %v525
    %713 = vmatprep.subr.bf16.mxu0 0
    %714 = vmatpush2.bf16.msra.mxu0 %v524
    %715 = vmatprep.subr.bf16.mxu0 0
    %716 = vmatpush2.bf16.msra.mxu0 %v523
    %717 = vmatprep.subr.bf16.mxu0 0
    %718 = vmatpush2.bf16.msra.mxu0 %v522
    %719 = vmatprep.subr.bf16.mxu0 0
    %720 = vmatpush2.bf16.msra.mxu0 %v521
    %721 = vmatprep.mubr.bf16.mxu0 %v212
    %722 = vmatmul.mubr.bf16.gmra.mxu0 %v198
    %v723 = vpop.f32.mrf.mxu0
    %v724 = vadd.f32 %v684, %v723
    %v725 = vpop.f32.mrf.mxu0
    %v726 = vpop.f32.mrf.mxu0
    %v727 = vpop.f32.mrf.mxu0
    %728 = vdwg.mxu0
    %729 = vmatprep.subr.bf16.mxu0 0
    %730 = vmatpush1.bf16.msra.mxu0 %v536
    %731 = vmatprep.subr.bf16.mxu0 0
    %732 = vmatpush1.bf16.msra.mxu0 %v535
    %733 = vmatprep.subr.bf16.mxu0 0
    %734 = vmatpush1.bf16.msra.mxu0 %v534
    %735 = vmatprep.subr.bf16.mxu0 0
    %736 = vmatpush1.bf16.msra.mxu0 %v533
    %737 = vmatprep.subr.bf16.mxu0 0
    %738 = vmatpush1.bf16.msra.mxu0 %v532
    %739 = vmatprep.subr.bf16.mxu0 0
    %740 = vmatpush1.bf16.msra.mxu0 %v531
    %741 = vmatprep.subr.bf16.mxu0 0
    %742 = vmatpush1.bf16.msra.mxu0 %v530
    %743 = vmatprep.subr.bf16.mxu0 0
    %744 = vmatpush1.bf16.msra.mxu0 %v529
    %745 = vmatprep.subr.bf16.mxu0 0
    %746 = vmatpush2.bf16.msra.mxu0 %v544
    %747 = vmatprep.subr.bf16.mxu0 0
    %748 = vmatpush2.bf16.msra.mxu0 %v543
    %749 = vmatprep.subr.bf16.mxu0 0
    %750 = vmatpush2.bf16.msra.mxu0 %v542
    %751 = vmatprep.subr.bf16.mxu0 0
    %752 = vmatpush2.bf16.msra.mxu0 %v541
    %753 = vmatprep.subr.bf16.mxu0 0
    %754 = vmatpush2.bf16.msra.mxu0 %v540
    %755 = vmatprep.subr.bf16.mxu0 0
    %756 = vmatpush2.bf16.msra.mxu0 %v539
    %757 = vmatprep.subr.bf16.mxu0 0
    %758 = vmatpush2.bf16.msra.mxu0 %v538
    %759 = vmatprep.subr.bf16.mxu0 0
    %760 = vmatpush2.bf16.msra.mxu0 %v537
    %761 = vmatprep.mubr.bf16.mxu0 %v216
    %762 = vmatmul.mubr.bf16.gmra.mxu0 %v214
    %v763 = vpop.f32.mrf.mxu0
    %v764 = vadd.f32 %v724, %v763
    %v765 = vpop.f32.mrf.mxu0
    %v766 = vpop.f32.mrf.mxu0
    %v767 = vpop.f32.mrf.mxu0
    %768 = vdwg.mxu0
    %v769 = vlaneseq
    %v770 = vshrl.u32 %v769, 7
    %v771 = vsub.s32 0, %v770
    %v772 = vrot.slane %v25, %v771
    %v773 = vadd.f32 %v764, %v772
    %v774 = vtanh.pop %v773
    %v775 = vpack.c.bf16 %v774, %v774
    %v776 = vld [vmem:[%s3] sm:$0xf]
    %v777 = vld [vmem:[%s3 + $0x4] sm:$0xf]
    %v778 = vld [vmem:[%s3 + $0x8] sm:$0xf]
    %v779 = vld [vmem:[%s3 + $0xc] sm:$0xf]
    %v780 = vld [vmem:[%s3 + $0x10] sm:$0xf]
    %v781 = vld [vmem:[%s3 + $0x14] sm:$0xf]
    %v782 = vld [vmem:[%s3 + $0x18] sm:$0xf]
    %v783 = vld [vmem:[%s3 + $0x1c] sm:$0xf]
    %v784 = vlaneseq
    %v785 = vshrl.u32 %v784, 7
    %v786 = vsub.s32 0, %v785
    %v787 = vrot.slane %v26, %v786
    %v796 = vunpack.c.l.b16 %v776
    %v797 = vunpack.c.l.b16 %v777
    %v798 = vunpack.c.l.b16 %v778
    %v799 = vunpack.c.l.b16 %v779
    %v800 = vunpack.c.l.b16 %v780
    %v801 = vunpack.c.l.b16 %v781
    %v802 = vunpack.c.l.b16 %v782
    %v803 = vunpack.c.l.b16 %v783
    %v804 = vpack.c.b16 %v797, %v796
    %v805 = vpack.c.b16 %v799, %v798
    %v806 = vpack.c.b16 %v801, %v800
    %v807 = vpack.c.b16 %v803, %v802
    %vm812 = vcmask 523264
    %v814 = vsel %vm812, %v775, 0
    %816 = vmatprep.subr.bf16.mxu0 0
    %817 = vmatpush1.bf16.msra.mxu0 0
    %818 = vmatprep.subr.bf16.mxu0 0
    %819 = vmatpush1.bf16.msra.mxu0 0
    %820 = vmatprep.subr.bf16.mxu0 0
    %821 = vmatpush1.bf16.msra.mxu0 0
    %822 = vmatprep.subr.bf16.mxu0 0
    %823 = vmatpush1.bf16.msra.mxu0 0
    %824 = vmatprep.subr.bf16.mxu0 0
    %825 = vmatpush1.bf16.msra.mxu0 %v807
    %826 = vmatprep.subr.bf16.mxu0 0
    %827 = vmatpush1.bf16.msra.mxu0 %v806
    %828 = vmatprep.subr.bf16.mxu0 0
    %829 = vmatpush1.bf16.msra.mxu0 %v805
    %830 = vmatprep.subr.bf16.mxu0 0
    %831 = vmatpush1.bf16.msra.mxu0 %v804
    %832 = vmatprep.subr.bf16.mxu0 0
    %833 = vmatpush2.bf16.msra.mxu0 0
    %834 = vmatprep.subr.bf16.mxu0 0
    %835 = vmatpush2.bf16.msra.mxu0 0
    %836 = vmatprep.subr.bf16.mxu0 0
    %837 = vmatpush2.bf16.msra.mxu0 0
    %838 = vmatprep.subr.bf16.mxu0 0
    %839 = vmatpush2.bf16.msra.mxu0 0
    %840 = vmatprep.subr.bf16.mxu0 0
    %841 = vmatpush2.bf16.msra.mxu0 0
    %842 = vmatprep.subr.bf16.mxu0 0
    %843 = vmatpush2.bf16.msra.mxu0 0
    %844 = vmatprep.subr.bf16.mxu0 0
    %845 = vmatpush2.bf16.msra.mxu0 0
    %846 = vmatprep.subr.bf16.mxu0 0
    %847 = vmatpush2.bf16.msra.mxu0 0
    %848 = vmatprep.mubr.bf16.mxu0 0
    %849 = vmatmul.mubr.bf16.gmra.mxu0 %v814
    %v850 = vpop.f32.mrf.mxu0
    %v851 = vadd.f32 %v787, %v850
    %v852 = vpop.f32.mrf.mxu0
    %v853 = vpop.f32.mrf.mxu0
    %v854 = vpop.f32.mrf.mxu0
    %855 = vdwg.mxu0
    %v856 = vtanh.pop %v851
    %v857 = vlaneseq
    %v858 = vshrl.u32 %v857, 7
    %v859 = vsub.s32 0, %v858
    %v860 = vrot.slane %v27, %v859
    %v861 = vmul.f32 %v856, %v860
    %vm862 = vcmask 517120
    %v863 = vsel %vm862, %v861, 0.0
    %864 = vadd.xlane.f32.xlu0 %v863
    %v865 = vpop.xlane.xlu0 %864
    %v866 = vlaneseq
    %v867 = vshrl.u32 %v866, 7
    %v868 = vsub.s32 0, %v867
    %v869 = vrot.slane %v28, %v868
    %v870 = vadd.f32 %v865, %v869
    %v871 = vlaneseq
    %v872 = vand.u32 %v871, 127
    %vm873 = vcmp.eq.s32.totalorder %v872, 0
    %v874 = vsel %vm873, 1.0, %v160
    %876 = vset.pattern.permute.xlu0 0
    %877 = vperm.xlu0 %876, %v870
    %v878 = vpop.permute.xlu0 %877
    %v880 = vmul.f32 %v878, %v874
    %vm881 = vcmask 9216
    %882 = vst.msk [vmem:[#allocation2] sm:$0x3] %vm881, %v880
    // Predicated region
    $region22: #{tpu_custom_call.1} parent=1 // pred_check
      _
    $region23: #{tpu_custom_call.1} parent=1 // pred_check_branch
      %884 = sbr.rel (0) target = $region25
    $region24: #{tpu_custom_call.1} parent=1 // pred_region
      %s886 = ssub.s32 32, 32
      %887 = vsyncadd [#allocation3], %s886
      %s889 = sshll.u32 [#allocation2], 4
      %s890 = int_to_ptr.vmem [resolvable:$true] %s889
      %892 = dma.vmem_to_hbm [thread:$0]  %s890, 32, %s5, [#allocation3]
    $region25: #{tpu_custom_call.1} parent=1 // pred_fallthru
      _
    // Predicated region
    $region26: #{tpu_custom_call.1} parent=1 // pred_check
      _
    $region27: #{tpu_custom_call.1} parent=1 // pred_check_branch
      %894 = sbr.rel (0) target = $region29
    $region28: #{tpu_custom_call.1} parent=1 // pred_region
      %895 = dma.done [#allocation3], 32
    $region29: #{tpu_custom_call.1} parent=1 // pred_fallthru
      _
    %896 = vsyncpa [#allocation3], 1

</llo_original>
